<compile_context>
chip_gen: v7x
topology: tpu7x:2x2x1
jax: 0.10.0
libtpu: 0.0.40
codegen_flags: <defaults>
</compile_context>

<pallas_src>
import jax
import jax.numpy as jnp
from jax.experimental import pallas as pl
from jax.experimental.pallas import tpu as pltpu

LANE = 128      # lane-dense padded output width for the fused heads
SUBLANE = 16    # bf16 sublane packing (rows per vreg)


def _round_up(x, m):
    return ((x + m - 1) // m) * m


def _choose_tb(b16):
    """Pick a sublane-aligned row tile balancing dead-row padding vs per-step overhead."""
    best_tb, best_cost = SUBLANE, None
    for tb in (512, 256, 128, 64, 32, 16):
        bp = _round_up(b16, tb)
        # cost (in "rows"): padded dead rows fully computed + ~per-grid-step overhead
        cost = (bp - b16) + (bp // tb) * 16
        if best_cost is None or cost < best_cost:
            best_cost, best_tb = cost, tb
    # v7x megacore: if only one grid step would be emitted, halve the tile so both
    # TensorCores get work (only when the halved tile stays sublane-aligned).
    if _round_up(b16, best_tb) // best_tb < 2 and best_tb >= 32:
        best_tb //= 2
    return best_tb


def _vmem_limit_bytes(tb, h, w_bufs):
    emb = tb * h * 2 * 2                     # bf16 CLS tile, double-buffered
    out = tb * LANE * 2 * 2                  # bf16 output tile, double-buffered
    wenc = h * h * 2 * w_bufs                # encoder weight (bf16)
    whead = h * LANE * 2 * w_bufs            # fused head weight (bf16)
    benc = _round_up(h, LANE) * 4 * w_bufs   # encoder bias (f32)
    total = emb + out + wenc + whead + benc
    return int(min(max(2 * total, 16 << 20), 64 << 20))


def _const_spec(shape, single_buffer):
    """BlockSpec for a grid-constant (index_map -> 0) operand; optionally single-buffered."""
    index_map = lambda i: (0,) * len(shape)
    if single_buffer:
        # index_map never changes, so one buffer is enough (halves the VMEM footprint
        # of large weights on v7x's 64 MiB / 32 MiB-scoped VMEM).
        return pl.BlockSpec(shape, index_map, pipeline_mode=pl.Buffered(1))
    return pl.BlockSpec(shape, index_map)


# ----------------------------------------------------------------------------
# Fused kernel: synthetic-encoder CLS projection + binary head + qa head.
#   h   = tanh(cls_emb @ W_enc + b_enc)                      (f32 epilogue, v5e-safe)
#   out = h @ [W_binary^T | W_qa^T | 0...]                   (lane-dense 128 cols, bf16)
# Mask gating and head bias are applied in the wrapper on the (B, 3) slice.
# ----------------------------------------------------------------------------
def fused_cls_kernel(emb_ref, w_enc_ref, b_enc_ref, w_heads_ref, out_ref):
    # Encoder projection on the CLS rows: bf16 operands streamed straight from HBM,
    # f32 accumulation on the MXU.
    h = jnp.dot(emb_ref[...], w_enc_ref[...], preferred_element_type=jnp.float32)
    h = jnp.tanh(h + b_enc_ref[...])                          # f32 epilogue (v5e-safe)
    # Fused heads: zero-padded (H, 128) weight -> lane-dense (TB, 128) output block.
    logits = jnp.dot(h.astype(jnp.bfloat16), w_heads_ref[...],
                     preferred_element_type=jnp.float32)
    out_ref[...] = logits.astype(out_ref.dtype)


def run_fused_cls(cls_emb, w_enc, b_enc, w_heads):
    B, H = cls_emb.shape
    B16 = _round_up(B, SUBLANE)
    TB = _choose_tb(B16)
    B_pad = _round_up(B16, TB)
    if B_pad != B:
        cls_emb = jnp.pad(cls_emb, ((0, B_pad - B), (0, 0)))

    # Single-buffer the grid-constant weights once their double-buffered footprint
    # would stress v7x's scoped VMEM (default 32 MiB); harmless no-op at small H.
    single_buffer = (2 * (H * H + H * LANE) * 2) > (16 << 20)
    w_bufs = 1 if single_buffer else 2

    out = pl.pallas_call(
        fused_cls_kernel,
        out_shape=jax.ShapeDtypeStruct((B_pad, LANE), jnp.bfloat16),
        grid=(B_pad // TB,),
        in_specs=[
            pl.BlockSpec((TB, H), lambda i: (i, 0)),     # CLS embeddings (bf16, streamed)
            _const_spec((H, H), single_buffer),          # encoder weight (bf16, resident)
            _const_spec((1, H), single_buffer),          # encoder bias (f32, resident)
            _const_spec((H, LANE), single_buffer),       # fused+padded head weight (bf16)
        ],
        out_specs=pl.BlockSpec((TB, LANE), lambda i: (i, 0)),
        compiler_params=pltpu.CompilerParams(
            dimension_semantics=("parallel",),
            vmem_limit_bytes=_vmem_limit_bytes(TB, H, w_bufs)),
    )(cls_emb, w_enc, b_enc, w_heads)
    return out[:B]


# ----------------------------------------------------------------------------
# Reranker forward
# ----------------------------------------------------------------------------
def reranker_forward(params, input_ids, attention_mask):
    N, M, L = input_ids.shape
    B = N * M
    ids_flat = input_ids.reshape(B, L)
    mask_flat = attention_mask.reshape(B, L)

    # Only the CLS (token-0) row of the encoder output feeds the heads, and the
    # synthetic encoder is row-local, so gather/encode just the B CLS rows (bf16).
    cls_ids = ids_flat[:, 0]                                          # (B,)
    cls_mask = mask_flat[:, 0].astype(jnp.float32)[:, None]           # (B, 1)
    cls_emb = jnp.take(params["emb_table"], cls_ids, axis=0)          # (B, H) bf16 gather
    # TODO(synk): for large B*H, fuse this gather into the kernel via
    #             PrefetchScalarGridSpec(num_scalar_prefetch=1) + per-row DMA from pl.ANY.

    raw = run_fused_cls(cls_emb, params["w_enc"], params["b_enc"],
                        params["w_heads"])                            # (B, 128) bf16

    # Mask gate + head bias on the tiny (B, 3) slice — exact, since the per-row mask
    # scalar commutes with the linear heads: ((tanh*m) @ W + b) == m*(tanh @ W) + b.
    logits = raw[:, :3].astype(jnp.float32) * cls_mask + params["b_heads"]
    binary_logits = logits[:, 0:2].reshape(N, M, 2)
    relevance_logits = logits[:, 2].reshape(N, M)
    return binary_logits, relevance_logits, None


# ----------------------------------------------------------------------------
# Deterministic parameter init (mirrors init_weights: normal(0, 0.02), zero bias).
# Weights / embedding table are stored bf16 so the kernel streams native MXU operands.
# ----------------------------------------------------------------------------
def make_params(key, vocab, hidden):
    k0, k1, k2, k3 = jax.random.split(key, 4)
    emb_table = (jax.random.normal(k0, (vocab, hidden), jnp.float32) * 0.02
                 ).astype(jnp.bfloat16)
    w_enc = (jax.random.normal(k1, (hidden, hidden), jnp.float32) * 0.02
             ).astype(jnp.bfloat16)
    b_enc = jnp.zeros((1, hidden), jnp.float32)
    # binary: Linear(hidden, 2); qa_classifier: Linear(hidden, 1) — torch (out, in) layout
    w_binary = jax.random.normal(k2, (2, hidden), jnp.float32) * 0.02
    w_qa = jax.random.normal(k3, (1, hidden), jnp.float32) * 0.02
    w_heads = jnp.concatenate([w_binary, w_qa], axis=0).T             # (hidden, 3)
    # Zero-pad the fused head weight to 128 lane-dense columns; columns 3..127 stay zero
    # and are sliced away in the wrapper, so columns 0..2 are numerically unchanged.
    w_heads = jnp.pad(w_heads, ((0, 0), (0, LANE - 3))).astype(jnp.bfloat16)
    b_heads = jnp.zeros((1, 3), jnp.float32)                          # zero bias (init_weights)
    return dict(emb_table=emb_table, w_enc=w_enc, b_enc=b_enc,
                w_heads=w_heads, b_heads=b_heads)


# Pure-JAX f32 reference (same bf16-stored weights, f32 math) for a sanity check.
def _reference(params, input_ids, attention_mask):
    N, M, L = input_ids.shape
    B = N * M
    cls_ids = input_ids.reshape(B, L)[:, 0]
    cls_mask = attention_mask.reshape(B, L)[:, 0].astype(jnp.float32)[:, None]
    cls_emb = jnp.take(params["emb_table"], cls_ids, axis=0).astype(jnp.float32)
    h = jnp.tanh(cls_emb @ params["w_enc"].astype(jnp.float32) + params["b_enc"]) * cls_mask
    logits = h @ params["w_heads"].astype(jnp.float32)[:, :3] + params["b_heads"]
    return logits[:, 0:2].reshape(N, M, 2), logits[:, 2].reshape(N, M)


if __name__ == "__main__":
    N, M, L, H, VOCAB = 2, 4, 8, 32, 64

    key = jax.random.PRNGKey(0)
    kp, ki, km = jax.random.split(key, 3)
    params = make_params(kp, VOCAB, H)

    input_ids = jax.random.randint(ki, (N, M, L), 0, VOCAB, dtype=jnp.int32)
    attention_mask = (jax.random.uniform(km, (N, M, L)) > 0.2).astype(jnp.int32)

    binary_logits, relevance_logits, extra = reranker_forward(
        params, input_ids, attention_mask)
    jax.block_until_ready((binary_logits, relevance_logits))

    assert binary_logits.shape == (N, M, 2)
    assert relevance_logits.shape == (N, M)
    assert extra is None

    ref_bin, ref_rel = _reference(params, input_ids, attention_mask)
    assert jnp.allclose(binary_logits, ref_bin, atol=1e-4, rtol=1e-2)
    assert jnp.allclose(relevance_logits, ref_rel, atol=1e-4, rtol=1e-2)

    print("KERNEL_OK")
</pallas_src>

<mosaic_0001>
module attributes {stable_mosaic.version = 11 : i64} {
  func.func @fused_cls_kernel(%arg0: i32, %arg1: memref<16x32xbf16, #tpu.memory_space<vmem>>, %arg2: memref<32x32xbf16, #tpu.memory_space<vmem>>, %arg3: memref<1x32xf32, #tpu.memory_space<vmem>>, %arg4: memref<32x128xbf16, #tpu.memory_space<vmem>>, %arg5: memref<16x128xbf16, #tpu.memory_space<vmem>>) attributes {dimension_semantics = [#tpu.dimension_semantics<parallel>], iteration_bounds = array<i64: 1>, scalar_prefetch = 0 : i64, scratch_operands = 0 : i64, tpu.core_type = #tpu.core_type<tc>, window_params = [{transform_indices = @transform_0, window_bounds = array<i64: 16, 32>}, {pipeline_mode = #tpu.pipeline_mode<synchronous>, transform_indices = @transform_1, window_bounds = array<i64: 32, 32>}, {pipeline_mode = #tpu.pipeline_mode<synchronous>, transform_indices = @transform_2, window_bounds = array<i64: 1, 32>}, {pipeline_mode = #tpu.pipeline_mode<synchronous>, transform_indices = @transform_3, window_bounds = array<i64: 32, 128>}, {transform_indices = @transform_4, window_bounds = array<i64: 16, 128>}]} {
    %c0 = arith.constant 0 : index
    %c0_0 = arith.constant 0 : index
    %0 = vector.load %arg1[%c0, %c0_0] : memref<16x32xbf16, #tpu.memory_space<vmem>>, vector<16x32xbf16>
    %c0_1 = arith.constant 0 : index
    %c0_2 = arith.constant 0 : index
    %1 = vector.load %arg2[%c0_1, %c0_2] : memref<32x32xbf16, #tpu.memory_space<vmem>>, vector<32x32xbf16>
    %cst = arith.constant dense<0.000000e+00> : vector<16x32xf32>
    %2 = tpu.matmul %0, %1, %cst {dimension_numbers = #tpu.dot_dimension_numbers<[1], [0], [0], [1], [0, 0, 1, 1], [], []>} : vector<16x32xbf16>, vector<32x32xbf16>, vector<16x32xf32> -> vector<16x32xf32>
    %c0_3 = arith.constant 0 : index
    %c0_4 = arith.constant 0 : index
    %3 = vector.load %arg3[%c0_3, %c0_4] : memref<1x32xf32, #tpu.memory_space<vmem>>, vector<1x32xf32>
    %4 = vector.broadcast %3 : vector<1x32xf32> to vector<16x32xf32>
    %5 = arith.addf %2, %4 : vector<16x32xf32>
    %6 = math.tanh %5 : vector<16x32xf32>
    %7 = arith.truncf %6 : vector<16x32xf32> to vector<16x32xbf16>
    %c0_5 = arith.constant 0 : index
    %c0_6 = arith.constant 0 : index
    %8 = vector.load %arg4[%c0_5, %c0_6] : memref<32x128xbf16, #tpu.memory_space<vmem>>, vector<32x128xbf16>
    %cst_7 = arith.constant dense<0.000000e+00> : vector<16x128xf32>
    %9 = tpu.matmul %7, %8, %cst_7 {dimension_numbers = #tpu.dot_dimension_numbers<[1], [0], [0], [1], [0, 0, 1, 1], [], []>} : vector<16x32xbf16>, vector<32x128xbf16>, vector<16x128xf32> -> vector<16x128xf32>
    %10 = arith.truncf %9 : vector<16x128xf32> to vector<16x128xbf16>
    %c0_8 = arith.constant 0 : index
    %c0_9 = arith.constant 0 : index
    %11 = vector.load %arg5[%c0_8, %c0_9] : memref<16x128xbf16, #tpu.memory_space<vmem>>, vector<16x128xbf16>
    tpu.vector_store %arg5[%c0_8, %c0_9], %10 {strides = array<i32>} : memref<16x128xbf16, #tpu.memory_space<vmem>>, vector<16x128xbf16>,
    return
  }
  func.func @transform_0(%arg0: i32) -> (i32, i32) {
    %c0_i32 = arith.constant 0 : i32
    %c0_i32_0 = arith.constant 0 : i32
    return %arg0, %c0_i32 : i32, i32
  }
  func.func @transform_1(%arg0: i32) -> (i32, i32) {
    %c0_i32 = arith.constant 0 : i32
    %c0_i32_0 = arith.constant 0 : i32
    %c0_i32_1 = arith.constant 0 : i32
    return %c0_i32, %c0_i32_0 : i32, i32
  }
  func.func @transform_2(%arg0: i32) -> (i32, i32) {
    %c0_i32 = arith.constant 0 : i32
    %c0_i32_0 = arith.constant 0 : i32
    %c0_i32_1 = arith.constant 0 : i32
    return %c0_i32, %c0_i32_0 : i32, i32
  }
  func.func @transform_3(%arg0: i32) -> (i32, i32) {
    %c0_i32 = arith.constant 0 : i32
    %c0_i32_0 = arith.constant 0 : i32
    %c0_i32_1 = arith.constant 0 : i32
    return %c0_i32, %c0_i32_0 : i32, i32
  }
  func.func @transform_4(%arg0: i32) -> (i32, i32) {
    %c0_i32 = arith.constant 0 : i32
    %c0_i32_0 = arith.constant 0 : i32
    return %arg0, %c0_i32 : i32, i32
  }
}

</mosaic_0001>

<llo_original>
// kernel: tpu_custom_call.1
$region0: #{tpu_custom_call.1}
  #allocation0 [shape = 'u32[]', space=smem, size = 0x4, offset = 0x4, fixed_abs, tag = 'smem constant byte address 0x4 - core index']
  #allocation1 [shape = 'u32[144,128]{1,0:T(1,128)}', space=vmem, size = 0x12000, scoped, tag = 'internal scratch']
  %s0 = inlined_call_operand.hbm [shape: bf16[16,32], index: 0, kind: input, shape index: {}]
  %s1 = inlined_call_operand.hbm [shape: bf16[32,32], index: 1, kind: input, shape index: {}]
  %s2 = inlined_call_operand.vmem [shape: f32[1,32], index: 2, kind: input, shape index: {}]
  %s3 = inlined_call_operand.hbm [shape: bf16[32,128], index: 3, kind: input, shape index: {}]
  %s4 = inlined_call_operand.hbm [shape: bf16[16,128], index: 4, kind: output, shape index: {}]
  %s5 = sld [smem:[#allocation0]]
  $region38: #{tpu_custom_call.1} parent=0
    _
  %s7 = ssub.s32 1, %s5
  %s8 = scalar_select 0, %s7, %s5
  $region1: #{tpu_custom_call.1} parent=0
    #allocation2 [shape = 'u8[4096]{0}', space=vmem, size = 0x1000, scoped, tag = 'input window, operand 0, single buffered']
    #allocation3 [shape = 's32[1]{0}', space=sflag, size = 0x4, scoped, tag = 'scoped memory for tpu_custom_call.1']
    #allocation4 [shape = 's32[1]{0}', space=sflag, size = 0x4, scoped, tag = 'scoped memory for tpu_custom_call.1']
    #allocation5 [shape = 'u8[8192]{0}', space=vmem, size = 0x2000, scoped, tag = 'input window, operand 1, single buffered']
    #allocation6 [shape = 's32[1]{0}', space=sflag, size = 0x4, scoped, tag = 'scoped memory for tpu_custom_call.1']
    #allocation7 [shape = 'u8[8192]{0}', space=vmem, size = 0x2000, scoped, tag = 'input window, operand 3, single buffered']
    #allocation8 [shape = 'u8[4096]{0}', space=vmem, size = 0x1000, scoped, tag = 'output window, operand 0, single buffered']
    %9 = vsyncpa [#allocation3], 0
    %10 = vsyncpa [#allocation6], 0
    %11 = vsyncpa [#allocation4], 0
    // Predicated region
    $region2: #{tpu_custom_call.1} parent=1 // pred_check
      _
    $region3: #{tpu_custom_call.1} parent=1 // pred_check_branch
      %13 = sbr.rel (0) target = $region5
    $region4: #{tpu_custom_call.1} parent=1 // pred_region
      %s15 = ssub.s32 128, 128
      %16 = vsyncadd [#allocation3], %s15
      %s17 = sshll.u32 [#allocation2], 4
      %s18 = int_to_ptr.vmem [resolvable:$true] %s17
      %23 = dma.hbm_to_vmem [thread:$0]  %s0, 128, %s18, [#allocation3], 64, 64, 4
    $region5: #{tpu_custom_call.1} parent=1 // pred_fallthru
      _
    // Predicated region
    $region6: #{tpu_custom_call.1} parent=1 // pred_check
      _
    $region7: #{tpu_custom_call.1} parent=1 // pred_check_branch
      %25 = sbr.rel (0) target = $region9
    $region8: #{tpu_custom_call.1} parent=1 // pred_region
      %s27 = ssub.s32 256, 256
      %28 = vsyncadd [#allocation6], %s27
      %s29 = sshll.u32 [#allocation5], 4
      %s30 = int_to_ptr.vmem [resolvable:$true] %s29
      %35 = dma.hbm_to_vmem [thread:$0]  %s1, 256, %s30, [#allocation6], 64, 64, 4
    $region9: #{tpu_custom_call.1} parent=1 // pred_fallthru
      _
    // Predicated region
    $region10: #{tpu_custom_call.1} parent=1 // pred_check
      _
    $region11: #{tpu_custom_call.1} parent=1 // pred_check_branch
      %37 = sbr.rel (0) target = $region13
    $region12: #{tpu_custom_call.1} parent=1 // pred_region
      _
    $region13: #{tpu_custom_call.1} parent=1 // pred_fallthru
      _
    // Predicated region
    $region14: #{tpu_custom_call.1} parent=1 // pred_check
      _
    $region15: #{tpu_custom_call.1} parent=1 // pred_check_branch
      %39 = sbr.rel (0) target = $region17
    $region16: #{tpu_custom_call.1} parent=1 // pred_region
      %s41 = ssub.s32 256, 256
      %42 = vsyncadd [#allocation6], %s41
      %s43 = sshll.u32 [#allocation7], 4
      %s44 = int_to_ptr.vmem [resolvable:$true] %s43
      %49 = dma.hbm_to_vmem [thread:$0]  %s3, 256, %s44, [#allocation6], 64, 64, 4
    $region17: #{tpu_custom_call.1} parent=1 // pred_fallthru
      _
    // Predicated region
    $region18: #{tpu_custom_call.1} parent=1 // pred_check
      _
    $region19: #{tpu_custom_call.1} parent=1 // pred_check_branch
      %51 = sbr.rel (0) target = $region21
    $region20: #{tpu_custom_call.1} parent=1 // pred_region
      %52 = dma.done [#allocation3], 128
    $region21: #{tpu_custom_call.1} parent=1 // pred_fallthru
      _
    // Predicated region
    $region22: #{tpu_custom_call.1} parent=1 // pred_check
      _
    $region23: #{tpu_custom_call.1} parent=1 // pred_check_branch
      %54 = sbr.rel (0) target = $region25
    $region24: #{tpu_custom_call.1} parent=1 // pred_region
      %55 = dma.done [#allocation6], 256
    $region25: #{tpu_custom_call.1} parent=1 // pred_fallthru
      _
    // Predicated region
    $region26: #{tpu_custom_call.1} parent=1 // pred_check
      _
    $region27: #{tpu_custom_call.1} parent=1 // pred_check_branch
      %57 = sbr.rel (0) target = $region29
    $region28: #{tpu_custom_call.1} parent=1 // pred_region
      %58 = dma.done [#allocation6], 256
    $region29: #{tpu_custom_call.1} parent=1 // pred_fallthru
      _
    %v60 = vld [vmem:[#allocation2] sm:$0xf]
    %v61 = vld [vmem:[#allocation2 + $0x4] sm:$0xf]
    %v62 = vld [vmem:[#allocation5] sm:$0xf]
    %v63 = vld [vmem:[#allocation5 + $0x4] sm:$0xf]
    %v64 = vld [vmem:[#allocation5 + $0x8] sm:$0xf]
    %v65 = vld [vmem:[#allocation5 + $0xc] sm:$0xf]
    %v66 = vld [vmem:[%s2] sm:$0x1]
    %v68 = vlaneseq
    %v69 = vshrl.u32 %v68, 7
    %v70 = vsub.s32 0, %v69
    %v71 = vrot.slane %v66, %v70
    %v75 = vunpack.c.l.b16 %v60
    %v76 = vunpack.c.l.b16 %v61
    %v77 = vpack.c.b16 %v76, %v75
    %v82 = vunpack.c.l.b16 %v62
    %v83 = vunpack.c.l.b16 %v63
    %v84 = vunpack.c.l.b16 %v64
    %v85 = vunpack.c.l.b16 %v65
    %v86 = vpack.c.b16 %v83, %v82
    %v87 = vpack.c.b16 %v85, %v84
    %vm90 = vcmask 261120
    %v92 = vsel %vm90, %v77, 0
    %94 = vmatprep.subr.bf16.mxu0 0
    %95 = vmatpush1.bf16.msra.mxu0 %v86
    %96 = vmatprep.subr.bf16.mxu0 0
    %97 = vmatpush1.bf16.msra.mxu0 %v87
    %98 = vmatprep.subr.bf16.mxu0 0
    %99 = vmatpush1.bf16.msra.mxu0 0
    %100 = vmatprep.subr.bf16.mxu0 0
    %101 = vmatpush1.bf16.msra.mxu0 0
    %102 = vmatprep.subr.bf16.mxu0 0
    %103 = vmatpush1.bf16.msra.mxu0 0
    %104 = vmatprep.subr.bf16.mxu0 0
    %105 = vmatpush1.bf16.msra.mxu0 0
    %106 = vmatprep.subr.bf16.mxu0 0
    %107 = vmatpush1.bf16.msra.mxu0 0
    %108 = vmatprep.subr.bf16.mxu0 0
    %109 = vmatpush1.bf16.msra.mxu0 0
    %110 = vmatprep.subr.bf16.mxu0 0
    %111 = vmatpush1.bf16.msra.mxu0 0
    %112 = vmatprep.subr.bf16.mxu0 0
    %113 = vmatpush1.bf16.msra.mxu0 0
    %114 = vmatprep.subr.bf16.mxu0 0
    %115 = vmatpush1.bf16.msra.mxu0 0
    %116 = vmatprep.subr.bf16.mxu0 0
    %117 = vmatpush1.bf16.msra.mxu0 0
    %118 = vmatprep.subr.bf16.mxu0 0
    %119 = vmatpush1.bf16.msra.mxu0 0
    %120 = vmatprep.subr.bf16.mxu0 0
    %121 = vmatpush1.bf16.msra.mxu0 0
    %122 = vmatprep.subr.bf16.mxu0 0
    %123 = vmatpush1.bf16.msra.mxu0 0
    %124 = vmatprep.subr.bf16.mxu0 0
    %125 = vmatpush1.bf16.msra.mxu0 0
    %126 = vmatprep.mubr.bf16.mxu0 0
    %127 = vmatmul.mubr.bf16.gmra.mrb[0].mxu0 %v92
    %v128 = vpop.f32.mrb[0].mxu0
    %v129 = vadd.f32 %v71, %v128
    %v130 = vpop.f32.mrb[0].mxu0
    %v131 = vpop.f32.mrb[0].mxu0
    %v132 = vadd.f32 %v71, %v131
    %v133 = vpop.f32.mrb[0].mxu0
    %134 = vdwg.mxu0
    %v135 = vtanh.pop %v129
    %v136 = vtanh.pop %v132
    %v137 = vpack.c.bf16 %v136, %v135
    %v138 = vld [vmem:[#allocation7] sm:$0xf]
    %v139 = vld [vmem:[#allocation7 + $0x4] sm:$0xf]
    %v140 = vld [vmem:[#allocation7 + $0x8] sm:$0xf]
    %v141 = vld [vmem:[#allocation7 + $0xc] sm:$0xf]
    %v146 = vunpack.c.l.b16 %v138
    %v147 = vunpack.c.l.b16 %v139
    %v148 = vunpack.c.l.b16 %v140
    %v149 = vunpack.c.l.b16 %v141
    %v150 = vpack.c.b16 %v147, %v146
    %v151 = vpack.c.b16 %v149, %v148
    %v155 = vsel %vm90, %v137, 0
    %157 = vmatprep.subr.bf16.mxu0 0
    %158 = vmatpush1.bf16.msra.mxu0 %v150
    %159 = vmatprep.subr.bf16.mxu0 0
    %160 = vmatpush1.bf16.msra.mxu0 %v151
    %161 = vmatprep.subr.bf16.mxu0 0
    %162 = vmatpush1.bf16.msra.mxu0 0
    %163 = vmatprep.subr.bf16.mxu0 0
    %164 = vmatpush1.bf16.msra.mxu0 0
    %165 = vmatprep.subr.bf16.mxu0 0
    %166 = vmatpush1.bf16.msra.mxu0 0
    %167 = vmatprep.subr.bf16.mxu0 0
    %168 = vmatpush1.bf16.msra.mxu0 0
    %169 = vmatprep.subr.bf16.mxu0 0
    %170 = vmatpush1.bf16.msra.mxu0 0
    %171 = vmatprep.subr.bf16.mxu0 0
    %172 = vmatpush1.bf16.msra.mxu0 0
    %173 = vmatprep.subr.bf16.mxu0 0
    %174 = vmatpush1.bf16.msra.mxu0 0
    %175 = vmatprep.subr.bf16.mxu0 0
    %176 = vmatpush1.bf16.msra.mxu0 0
    %177 = vmatprep.subr.bf16.mxu0 0
    %178 = vmatpush1.bf16.msra.mxu0 0
    %179 = vmatprep.subr.bf16.mxu0 0
    %180 = vmatpush1.bf16.msra.mxu0 0
    %181 = vmatprep.subr.bf16.mxu0 0
    %182 = vmatpush1.bf16.msra.mxu0 0
    %183 = vmatprep.subr.bf16.mxu0 0
    %184 = vmatpush1.bf16.msra.mxu0 0
    %185 = vmatprep.subr.bf16.mxu0 0
    %186 = vmatpush1.bf16.msra.mxu0 0
    %187 = vmatprep.subr.bf16.mxu0 0
    %188 = vmatpush1.bf16.msra.mxu0 0
    %189 = vmatprep.mubr.bf16.mxu0 0
    %190 = vmatmul.mubr.bf16.gmra.mrb[0].mxu0 %v155
    %v191 = vpop.f32.mrb[0].mxu0
    %v192 = vadd.f32 0.0, %v191
    %v193 = vpop.f32.mrb[0].mxu0
    %v194 = vpop.f32.mrb[0].mxu0
    %v195 = vadd.f32 0.0, %v194
    %v196 = vpop.f32.mrb[0].mxu0
    %197 = vdwg.mxu0
    %v198 = vpack.c.bf16 %v195, %v192
    %v200 = vunpack.c.l.b16 %v198
    %v201 = vunpack.c.h.b16 %v198
    %v202 = vpack.c.b16 %v200, %v200
    %v203 = vpack.c.b16 %v201, %v201
    %206 = vst [vmem:[#allocation8] sm:$0xf] %v202
    %207 = vst [vmem:[#allocation8 + $0x4] sm:$0xf] %v203
    // Predicated region
    $region30: #{tpu_custom_call.1} parent=1 // pred_check
      _
    $region31: #{tpu_custom_call.1} parent=1 // pred_check_branch
      %209 = sbr.rel (0) target = $region33
    $region32: #{tpu_custom_call.1} parent=1 // pred_region
      %s211 = ssub.s32 128, 128
      %212 = vsyncadd [#allocation4], %s211
      %s213 = sshll.u32 [#allocation8], 4
      %s214 = int_to_ptr.vmem [resolvable:$true] %s213
      %219 = dma.vmem_to_hbm [thread:$0]  %s214, 128, %s4, [#allocation4], 64, 64, 4
    $region33: #{tpu_custom_call.1} parent=1 // pred_fallthru
      _
    // Predicated region
    $region34: #{tpu_custom_call.1} parent=1 // pred_check
      _
    $region35: #{tpu_custom_call.1} parent=1 // pred_check_branch
      %221 = sbr.rel (0) target = $region37
    $region36: #{tpu_custom_call.1} parent=1 // pred_region
      %222 = dma.done [#allocation4], 128
    $region37: #{tpu_custom_call.1} parent=1 // pred_fallthru
      _
    %223 = vsyncpa [#allocation3], 1
    %224 = vsyncpa [#allocation6], 1
    %225 = vsyncpa [#allocation4], 1

</llo_original>
